<compile_context>
chip_gen: v6e
topology: v6e:2x2x1
jax: 0.10.0
libtpu: 0.0.40
codegen_flags: <defaults>
</compile_context>

<pallas_src>
import jax
import jax.numpy as jnp
from jax.experimental import pallas as pl
from jax.experimental.pallas import tpu as pltpu


def bottleneck_forward(x, v, g, bias, *, tile_t=None, compute_dtype=None):
    """Weight-normed Conv1d(k=3, pad=1) + ReLU.

    x:    (B, C_in, T)        activations (NCW, like PyTorch Conv1d input)
    v:    (C_out, C_in, 3)    weight_norm 'v' parameter
    g:    (C_out,)            weight_norm 'g' parameter
    bias: (C_out,)            conv bias
    """
    B, C_in, T = x.shape
    C_out = v.shape[0]

    if compute_dtype is None:
        compute_dtype = x.dtype

    # ---- tile-size selection (lane-dense output blocks) -------------------
    if tile_t is None:
        tile_t = T if T <= 512 else 512
    tile_t = min(tile_t, T)
    if tile_t < T:
        # (8, 128) rule: a non-full last block dim must be a multiple of 128.
        assert tile_t % 128 == 0, "tile_t must be a multiple of 128 when < T"
    num_t = pl.cdiv(T, tile_t)
    needs_tail_mask = (T % tile_t) != 0

    # ---- parameter glue: weight_norm(dim=0), fused 3-tap weight ------------
    v32 = v.astype(jnp.float32)
    g32 = g.astype(jnp.float32)
    v_norm = jnp.sqrt(jnp.sum(v32 * v32, axis=(1, 2), keepdims=True))
    w = g32[:, None, None] * v32 / v_norm                      # (C_out, C_in, 3)
    # K layout matches the in-kernel operand stack [x[t-1]; x[t]; x[t+1]].
    w_fused = jnp.concatenate(
        [w[:, :, 0], w[:, :, 1], w[:, :, 2]], axis=1
    ).astype(compute_dtype)                                     # (C_out, 3*C_in)
    b2 = bias.astype(jnp.float32).reshape(C_out, 1)

    # ---- activations: NO padded HBM copy; just (optional) dtype cast -------
    x_c = x.astype(compute_dtype)

    # ---- tiny cross-tile halo columns (zero at sequence boundaries) --------
    tstarts = jnp.arange(num_t, dtype=jnp.int32) * tile_t
    left_src = tstarts - 1                    # column feeding tap k=0 at tile start
    right_src = tstarts + tile_t              # column feeding tap k=2 at tile end
    left_cols = jnp.take(x_c, jnp.clip(left_src, 0, T - 1), axis=2)    # (B, C_in, num_t)
    right_cols = jnp.take(x_c, jnp.clip(right_src, 0, T - 1), axis=2)
    left_cols = jnp.where((left_src >= 0)[None, None, :], left_cols,
                          jnp.zeros_like(left_cols))
    right_cols = jnp.where((right_src < T)[None, None, :], right_cols,
                           jnp.zeros_like(right_cols))
    left_halo = jnp.transpose(left_cols, (0, 2, 1))[..., None]   # (B, num_t, C_in, 1)
    right_halo = jnp.transpose(right_cols, (0, 2, 1))[..., None]

    # ---- kernel -------------------------------------------------------------
    def kernel(x_ref, w_ref, b_ref, lh_ref, rh_ref, o_ref):
        # x_ref : (1, C_in, tile_t)
        # w_ref : (C_out, 3*C_in)        fused taps [k=0 | k=1 | k=2]
        # b_ref : (C_out, 1)             f32 bias
        # lh_ref: (1, 1, C_in, 1)        x[:, tile_start - 1] (or zeros)
        # rh_ref: (1, 1, C_in, 1)        x[:, tile_end]       (or zeros)
        # o_ref : (1, C_out, tile_t)
        x_t = x_ref[0]                                           # (C_in, tile_t)
        col = jax.lax.broadcasted_iota(jnp.int32, x_t.shape, 1)

        if needs_tail_mask:
            # Zero columns past T so the shifted operands never read garbage
            # from the padded tail of the last (partial) tile.
            j = pl.program_id(1)
            x_t = jnp.where(col + j * tile_t < T, x_t, jnp.zeros_like(x_t))

        lh = jnp.reshape(lh_ref[...], (x_t.shape[0], 1))         # (C_in, 1)
        rh = jnp.reshape(rh_ref[...], (x_t.shape[0], 1))

        # Time shifts on the XLU (roll), wrap column fixed up from the halos.
        x_prev = jnp.where(col == 0, lh, pltpu.roll(x_t, 1, axis=1))
        x_next = jnp.where(col == tile_t - 1, rh,
                           pltpu.roll(x_t, tile_t - 1, axis=1))

        # Single fused MXU pass: (C_out, 3*C_in) @ (3*C_in, tile_t), f32 acc.
        stacked = jnp.concatenate([x_prev, x_t, x_next], axis=0)
        y = jnp.dot(w_ref[...], stacked, preferred_element_type=jnp.float32)
        y = y + b_ref[...]                                       # bias (f32)
        o_ref[0] = jnp.maximum(y, 0.0).astype(o_ref.dtype)       # ReLU

    out = pl.pallas_call(
        kernel,
        out_shape=jax.ShapeDtypeStruct((B, C_out, T), x.dtype),
        grid_spec=pltpu.PrefetchScalarGridSpec(
            num_scalar_prefetch=0,
            grid=(B, num_t),
            in_specs=[
                pl.BlockSpec((1, C_in, tile_t), lambda b, j: (b, 0, j)),
                pl.BlockSpec((C_out, 3 * C_in), lambda b, j: (0, 0)),
                pl.BlockSpec((C_out, 1), lambda b, j: (0, 0)),
                pl.BlockSpec((1, 1, C_in, 1), lambda b, j: (b, j, 0, 0)),
                pl.BlockSpec((1, 1, C_in, 1), lambda b, j: (b, j, 0, 0)),
            ],
            out_specs=pl.BlockSpec((1, C_out, tile_t), lambda b, j: (b, 0, j)),
        ),
        compiler_params=pltpu.CompilerParams(
            dimension_semantics=("parallel", "parallel"),
            vmem_limit_bytes=32 * 1024 * 1024,
        ),
    )(x_c, w_fused, b2, left_halo, right_halo)
    return out


def _reference(x, v, g, bias):
    """Pure-JAX reference of weight-normed Conv1d(k=3, pad=1) + ReLU."""
    v = v.astype(jnp.float32)
    g = g.astype(jnp.float32)
    norm = jnp.sqrt(jnp.sum(v * v, axis=(1, 2), keepdims=True))
    w = g[:, None, None] * v / norm                              # (C_out, C_in, 3)
    x_pad = jnp.pad(x.astype(jnp.float32), ((0, 0), (0, 0), (1, 1)))
    T = x.shape[2]
    y = bias.astype(jnp.float32)[None, :, None]
    for k in range(3):
        y = y + jnp.einsum("oi,bit->bot", w[:, :, k], x_pad[:, :, k:k + T])
    return jnp.maximum(y, 0.0)


if __name__ == "__main__":
    # Shapes consistent with the module: in_dim=32, reduction_factor=4 -> out_dim=8
    B, C_in, T = 2, 32, 16
    reduction_factor = 4
    C_out = C_in // reduction_factor

    key = jax.random.PRNGKey(0)
    kx, kv, kg, kb = jax.random.split(key, 4)
    x = jax.random.normal(kx, (B, C_in, T), dtype=jnp.float32)
    v = 0.1 * jax.random.normal(kv, (C_out, C_in, 3), dtype=jnp.float32)   # weight_norm "v"
    g = 1.0 + 0.1 * jax.random.normal(kg, (C_out,), dtype=jnp.float32)     # weight_norm "g"
    bias = 0.1 * jax.random.normal(kb, (C_out,), dtype=jnp.float32)

    # 1) Primary check: tiny demo shape (single time tile per batch).
    out = jax.block_until_ready(bottleneck_forward(x, v, g, bias))
    ref = _reference(x, v, g, bias)
    assert out.shape == (B, C_out, T)
    assert jnp.allclose(out, ref, atol=1e-4, rtol=1e-4), "mismatch vs reference (f32)"

    # 2) Multi-tile + ragged-tail path: exercises cross-tile halo and tail mask.
    T2 = 200
    x2 = jax.random.normal(kx, (B, C_in, T2), dtype=jnp.float32)
    out2 = jax.block_until_ready(bottleneck_forward(x2, v, g, bias, tile_t=128))
    ref2 = _reference(x2, v, g, bias)
    assert jnp.allclose(out2, ref2, atol=1e-4, rtol=1e-4), "mismatch vs reference (tiled)"

    # 3) bf16 fast path (half the HBM read traffic, f32 accumulation).
    out3 = jax.block_until_ready(
        bottleneck_forward(x, v, g, bias, compute_dtype=jnp.bfloat16))
    assert jnp.allclose(out3, ref, atol=5e-2, rtol=5e-2), "mismatch vs reference (bf16)"

    print("KERNEL_OK")
</pallas_src>

<mosaic_0001>
module attributes {stable_mosaic.version = 11 : i64} {
  func.func @kernel(%arg0: i32, %arg1: i32, %arg2: memref<1x32x16xf32, #tpu.memory_space<vmem>>, %arg3: memref<8x96xf32, #tpu.memory_space<vmem>>, %arg4: memref<8x1xf32, #tpu.memory_space<vmem>>, %arg5: memref<1x1x32x1xf32, #tpu.memory_space<vmem>>, %arg6: memref<1x1x32x1xf32, #tpu.memory_space<vmem>>, %arg7: memref<1x8x16xf32, #tpu.memory_space<vmem>>) attributes {dimension_semantics = [#tpu.dimension_semantics<parallel>, #tpu.dimension_semantics<parallel>], iteration_bounds = array<i64: 2, 1>, scalar_prefetch = 0 : i64, scratch_operands = 0 : i64, tpu.core_type = #tpu.core_type<tc>, window_params = [{transform_indices = @transform_0, window_bounds = array<i64: 1, 32, 16>}, {pipeline_mode = #tpu.pipeline_mode<synchronous>, transform_indices = @transform_1, window_bounds = array<i64: 8, 96>}, {pipeline_mode = #tpu.pipeline_mode<synchronous>, transform_indices = @transform_2, window_bounds = array<i64: 8, 1>}, {transform_indices = @transform_3, window_bounds = array<i64: 1, 1, 32, 1>}, {transform_indices = @transform_4, window_bounds = array<i64: 1, 1, 32, 1>}, {transform_indices = @transform_5, window_bounds = array<i64: 1, 8, 16>}]} {
    %c0 = arith.constant 0 : index
    %c0_0 = arith.constant 0 : index
    %c0_1 = arith.constant 0 : index
    %0 = vector.load %arg2[%c0, %c0_0, %c0_1] : memref<1x32x16xf32, #tpu.memory_space<vmem>>, vector<1x32x16xf32>
    %1 = vector.shape_cast %0 : vector<1x32x16xf32> to vector<32x16xf32>
    %2 = tpu.iota {dimensions = array<i32: 1>} : vector<32x16xi32>
    %c0_2 = arith.constant 0 : index
    %c0_3 = arith.constant 0 : index
    %c0_4 = arith.constant 0 : index
    %c0_5 = arith.constant 0 : index
    %3 = vector.load %arg5[%c0_2, %c0_3, %c0_4, %c0_5] : memref<1x1x32x1xf32, #tpu.memory_space<vmem>>, vector<1x1x32x1xf32>
    %4 = vector.shape_cast %3 : vector<1x1x32x1xf32> to vector<32x1xf32>
    %c0_6 = arith.constant 0 : index
    %c0_7 = arith.constant 0 : index
    %c0_8 = arith.constant 0 : index
    %c0_9 = arith.constant 0 : index
    %5 = vector.load %arg6[%c0_6, %c0_7, %c0_8, %c0_9] : memref<1x1x32x1xf32, #tpu.memory_space<vmem>>, vector<1x1x32x1xf32>
    %6 = vector.shape_cast %5 : vector<1x1x32x1xf32> to vector<32x1xf32>
    %c0_i32 = arith.constant 0 : i32
    %7 = vector.broadcast %c0_i32 : i32 to vector<32x16xi32>
    %8 = arith.cmpi eq, %2, %7 : vector<32x16xi32>
    %c1_i32 = arith.constant 1 : i32
    %9 = tpu.dynamic_rotate %1 by %c1_i32 dim 1 : vector<32x16xf32>, i32 -> vector<32x16xf32>
    %10 = vector.shape_cast %4 : vector<32x1xf32> to vector<32x1xf32>
    %11 = vector.broadcast %10 : vector<32x1xf32> to vector<32x16xf32>
    %12 = arith.select %8, %11, %9 : vector<32x16xi1>, vector<32x16xf32>
    %c15_i32 = arith.constant 15 : i32
    %13 = vector.broadcast %c15_i32 : i32 to vector<32x16xi32>
    %14 = arith.cmpi eq, %2, %13 : vector<32x16xi32>
    %c15_i32_10 = arith.constant 15 : i32
    %15 = tpu.dynamic_rotate %1 by %c15_i32_10 dim 1 : vector<32x16xf32>, i32 -> vector<32x16xf32>
    %16 = vector.shape_cast %6 : vector<32x1xf32> to vector<32x1xf32>
    %17 = vector.broadcast %16 : vector<32x1xf32> to vector<32x16xf32>
    %18 = arith.select %14, %17, %15 : vector<32x16xi1>, vector<32x16xf32>
    %19 = tpu.concatenate %12, %1, %18 in 0 : vector<32x16xf32>, vector<32x16xf32>, vector<32x16xf32> -> vector<96x16xf32>
    %c0_11 = arith.constant 0 : index
    %c0_12 = arith.constant 0 : index
    %20 = vector.load %arg3[%c0_11, %c0_12] : memref<8x96xf32, #tpu.memory_space<vmem>>, vector<8x96xf32>
    %cst = arith.constant dense<0.000000e+00> : vector<8x16xf32>
    %21 = tpu.matmul %20, %19, %cst {dimension_numbers = #tpu.dot_dimension_numbers<[1], [0], [0], [1], [0, 0, 1, 1], [], []>} : vector<8x96xf32>, vector<96x16xf32>, vector<8x16xf32> -> vector<8x16xf32>
    %c0_13 = arith.constant 0 : index
    %c0_14 = arith.constant 0 : index
    %22 = vector.load %arg4[%c0_13, %c0_14] : memref<8x1xf32, #tpu.memory_space<vmem>>, vector<8x1xf32>
    %23 = vector.broadcast %22 : vector<8x1xf32> to vector<8x16xf32>
    %24 = arith.addf %21, %23 : vector<8x16xf32>
    %cst_15 = arith.constant 0.000000e+00 : f32
    %25 = vector.broadcast %cst_15 : f32 to vector<8x16xf32>
    %26 = arith.maximumf %24, %25 : vector<8x16xf32>
    %c0_16 = arith.constant 0 : index
    %c0_17 = arith.constant 0 : index
    %c0_18 = arith.constant 0 : index
    %27 = vector.load %arg7[%c0_16, %c0_17, %c0_18] : memref<1x8x16xf32, #tpu.memory_space<vmem>>, vector<1x8x16xf32>
    %28 = vector.shape_cast %27 : vector<1x8x16xf32> to vector<8x16xf32>
    %29 = vector.shape_cast %26 : vector<8x16xf32> to vector<1x8x16xf32>
    tpu.vector_store %arg7[%c0_16, %c0_17, %c0_18], %29 {strides = array<i32>} : memref<1x8x16xf32, #tpu.memory_space<vmem>>, vector<1x8x16xf32>,
    return
  }
  func.func @transform_0(%arg0: i32, %arg1: i32) -> (i32, i32, i32) {
    %c0_i32 = arith.constant 0 : i32
    %c0_i32_0 = arith.constant 0 : i32
    return %arg0, %c0_i32, %arg1 : i32, i32, i32
  }
  func.func @transform_1(%arg0: i32, %arg1: i32) -> (i32, i32) {
    %c0_i32 = arith.constant 0 : i32
    %c0_i32_0 = arith.constant 0 : i32
    %c0_i32_1 = arith.constant 0 : i32
    return %c0_i32, %c0_i32_0 : i32, i32
  }
  func.func @transform_2(%arg0: i32, %arg1: i32) -> (i32, i32) {
    %c0_i32 = arith.constant 0 : i32
    %c0_i32_0 = arith.constant 0 : i32
    %c0_i32_1 = arith.constant 0 : i32
    return %c0_i32, %c0_i32_0 : i32, i32
  }
  func.func @transform_3(%arg0: i32, %arg1: i32) -> (i32, i32, i32, i32) {
    %c0_i32 = arith.constant 0 : i32
    %c0_i32_0 = arith.constant 0 : i32
    %c0_i32_1 = arith.constant 0 : i32
    return %arg0, %arg1, %c0_i32, %c0_i32_0 : i32, i32, i32, i32
  }
  func.func @transform_4(%arg0: i32, %arg1: i32) -> (i32, i32, i32, i32) {
    %c0_i32 = arith.constant 0 : i32
    %c0_i32_0 = arith.constant 0 : i32
    %c0_i32_1 = arith.constant 0 : i32
    return %arg0, %arg1, %c0_i32, %c0_i32_0 : i32, i32, i32, i32
  }
  func.func @transform_5(%arg0: i32, %arg1: i32) -> (i32, i32, i32) {
    %c0_i32 = arith.constant 0 : i32
    %c0_i32_0 = arith.constant 0 : i32
    return %arg0, %c0_i32, %arg1 : i32, i32, i32
  }
}

</mosaic_0001>

<llo_original>
// kernel: tpu_custom_call.1
$region0: #{tpu_custom_call.1}
  #allocation0 [shape = 'u32[]', space=smem, size = 0x4, offset = 0x4, fixed_abs, tag = 'smem constant byte address 0x4 - core index']
  #allocation1 [shape = 'u32[144,128]{1,0:T(1,128)}', space=vmem, size = 0x12000, scoped, tag = 'internal scratch']
  %s0 = inlined_call_operand.vmem [shape: f32[2,32,16], index: 0, kind: input, shape index: {}]
  %s1 = inlined_call_operand.vmem [shape: f32[8,96], index: 1, kind: input, shape index: {}]
  %s2 = inlined_call_operand.vmem [shape: f32[8,1], index: 2, kind: input, shape index: {}]
  %s3 = inlined_call_operand.vmem [shape: f32[2,1,32,1], index: 3, kind: input, shape index: {}]
  %s4 = inlined_call_operand.vmem [shape: f32[2,1,32,1], index: 4, kind: input, shape index: {}]
  %s5 = inlined_call_operand.hbm [shape: f32[2,8,16], index: 5, kind: output, shape index: {}]
  %s6 = sld [smem:[#allocation0]]
  $region53: #{tpu_custom_call.1} parent=0
    _
  %s8 = ssub.s32 1, %s6
  %s9 = scalar_select 0, %s8, %s6
  $region1: #{tpu_custom_call.1} parent=0
    #allocation2 [shape = 'u8[8192]{0}', space=vmem, size = 0x2000, scoped, tag = 'output window, operand 0']
    #allocation3 [shape = 's32[2]{0}', space=sflag, size = 0x8, scoped, tag = 'scoped memory for tpu_custom_call.1']
    %10 = vsyncpa [#allocation3], 0
    %s11 = scalar_lea.sflag [#allocation3], 1
    %12 = vsyncpa %s11, 0
    loop: start=0, step=1, limit=4
    $region2: #{tpu_custom_call.1} parent=1 // loop_pre_header
      _
    $region3: #{tpu_custom_call.1} parent=1 // loop_header
      %s14 = sphi 0, %s18
      %p15 = scmp.ge.s32.totalorder %s14, 4
      %s21 = sphi 0, %s33
      %s22 = sphi 0, %s29
      %s23 = sphi 0, %s21
      %s24 = sphi 0, %s22
      %s25 = sphi 0, %s23
      %s26 = sphi 0, %s24
      %s38 = sphi 0, %s40
      %s41 = sphi 0, %s38
      %s42 = sphi 0, %s41
      %s58 = sphi 0, %s42
      %s62 = sphi 0, %s62
      %s64 = sphi 0, %s62
      %s65 = sphi 0, %s64
      %s79 = sphi 0, %s65
      %s83 = sphi 0, %s83
      %s85 = sphi 0, %s83
      %s86 = sphi 0, %s85
      %s100 = sphi 0, %s86
      %s108 = sphi 0, %s110
      %s111 = sphi 0, %s108
      %s112 = sphi 0, %s111
      %s128 = sphi 0, %s112
      %s136 = sphi 0, %s138
      %s139 = sphi 0, %s136
      %s140 = sphi 0, %s139
      %s156 = sphi 0, %s140
      %s164 = sphi 0, %s166
      %s167 = sphi 0, %s164
      %s168 = sphi 0, %s167
      %s184 = sphi 0, %s168
    $region4: #{tpu_custom_call.1} parent=1 // loop_header_branch
      %17 = sbr.rel (%p15) target = $region8
    $region5: #{tpu_custom_call.1} parent=1 // loop_body
      %s19 = ssub.s32 %s14, 1
      %s20 = ssub.s32 %s14, 2
      %s27 = sadd.s32 1, %s22
      %p28 = scmp.ge.s32.totalorder %s27, 1
      %s29 = scalar_select %p28, 0, %s27
      %s30 = sadd.s32 1, %s21
      %s31 = scalar_select %p28, %s30, %s21
      %p32 = scmp.ge.s32.totalorder %s31, 2
      %s33 = scalar_select %p32, 0, %s31
      %s34 = ssub.s32 %s21, %s33
      %s35 = ssub.s32 %s22, %s29
      %s36 = sor.u32 %s34, %s35
      %p37 = scmp.eq.s32.totalorder %s36, 0
      %s39 = sadd.s32 %s38, 1
      %s40 = scalar_select %p37, %s38, %s39
      %p43 = pneg %p37
      %p44 = scmp.eq.s32.totalorder %s14, 1
      %p45 = por %p43, %p44
      %p46 = scmp.ne.s32.totalorder %s38, %s41
      %p47 = scmp.eq.s32.totalorder %s14, 0
      %p48 = por %p46, %p47
      %p49 = scmp.ne.s32.totalorder %s38, %s41
      %p50 = scmp.eq.s32.totalorder %s19, 1
      %p51 = por %p49, %p50
      %p52 = scmp.ne.s32.totalorder %s41, %s42
      %p53 = scmp.eq.s32.totalorder %s19, 0
      %p54 = por %p52, %p53
      %p55 = scmp.ne.s32.totalorder %s41, %s42
      %p56 = scmp.eq.s32.totalorder %s20, 1
      %p57 = por %p55, %p56
      %p59 = scmp.ne.s32.totalorder %s42, %s58
      %p60 = scmp.eq.s32.totalorder %s20, 0
      %p61 = por %p59, %p60
      %s63 = sadd.s32 %s62, 1
      %p66 = scmp.eq.s32.totalorder %s14, 1
      %p67 = scmp.ne.s32.totalorder %s62, %s64
      %p68 = scmp.eq.s32.totalorder %s14, 0
      %p69 = por %p67, %p68
      %p70 = scmp.ne.s32.totalorder %s62, %s64
      %p71 = scmp.eq.s32.totalorder %s19, 1
      %p72 = por %p70, %p71
      %p73 = scmp.ne.s32.totalorder %s64, %s65
      %p74 = scmp.eq.s32.totalorder %s19, 0
      %p75 = por %p73, %p74
      %p76 = scmp.ne.s32.totalorder %s64, %s65
      %p77 = scmp.eq.s32.totalorder %s20, 1
      %p78 = por %p76, %p77
      %p80 = scmp.ne.s32.totalorder %s65, %s79
      %p81 = scmp.eq.s32.totalorder %s20, 0
      %p82 = por %p80, %p81
      %s84 = sadd.s32 %s83, 1
      %p87 = scmp.eq.s32.totalorder %s14, 1
      %p88 = scmp.ne.s32.totalorder %s83, %s85
      %p89 = scmp.eq.s32.totalorder %s14, 0
      %p90 = por %p88, %p89
      %p91 = scmp.ne.s32.totalorder %s83, %s85
      %p92 = scmp.eq.s32.totalorder %s19, 1
      %p93 = por %p91, %p92
      %p94 = scmp.ne.s32.totalorder %s85, %s86
      %p95 = scmp.eq.s32.totalorder %s19, 0
      %p96 = por %p94, %p95
      %p97 = scmp.ne.s32.totalorder %s85, %s86
      %p98 = scmp.eq.s32.totalorder %s20, 1
      %p99 = por %p97, %p98
      %p101 = scmp.ne.s32.totalorder %s86, %s100
      %p102 = scmp.eq.s32.totalorder %s20, 0
      %p103 = por %p101, %p102
      %s104 = ssub.s32 %s21, %s33
      %s105 = ssub.s32 %s22, %s29
      %s106 = sor.u32 %s104, %s105
      %p107 = scmp.eq.s32.totalorder %s106, 0
      %s109 = sadd.s32 %s108, 1
      %s110 = scalar_select %p107, %s108, %s109
      %p113 = pneg %p107
      %p114 = scmp.eq.s32.totalorder %s14, 1
      %p115 = por %p113, %p114
      %p116 = scmp.ne.s32.totalorder %s108, %s111
      %p117 = scmp.eq.s32.totalorder %s14, 0
      %p118 = por %p116, %p117
      %p119 = scmp.ne.s32.totalorder %s108, %s111
      %p120 = scmp.eq.s32.totalorder %s19, 1
      %p121 = por %p119, %p120
      %p122 = scmp.ne.s32.totalorder %s111, %s112
      %p123 = scmp.eq.s32.totalorder %s19, 0
      %p124 = por %p122, %p123
      %p125 = scmp.ne.s32.totalorder %s111, %s112
      %p126 = scmp.eq.s32.totalorder %s20, 1
      %p127 = por %p125, %p126
      %p129 = scmp.ne.s32.totalorder %s112, %s128
      %p130 = scmp.eq.s32.totalorder %s20, 0
      %p131 = por %p129, %p130
      %s132 = ssub.s32 %s21, %s33
      %s133 = ssub.s32 %s22, %s29
      %s134 = sor.u32 %s132, %s133
      %p135 = scmp.eq.s32.totalorder %s134, 0
      %s137 = sadd.s32 %s136, 1
      %s138 = scalar_select %p135, %s136, %s137
      %p141 = pneg %p135
      %p142 = scmp.eq.s32.totalorder %s14, 1
      %p143 = por %p141, %p142
      %p144 = scmp.ne.s32.totalorder %s136, %s139
      %p145 = scmp.eq.s32.totalorder %s14, 0
      %p146 = por %p144, %p145
      %p147 = scmp.ne.s32.totalorder %s136, %s139
      %p148 = scmp.eq.s32.totalorder %s19, 1
      %p149 = por %p147, %p148
      %p150 = scmp.ne.s32.totalorder %s139, %s140
      %p151 = scmp.eq.s32.totalorder %s19, 0
      %p152 = por %p150, %p151
      %p153 = scmp.ne.s32.totalorder %s139, %s140
      %p154 = scmp.eq.s32.totalorder %s20, 1
      %p155 = por %p153, %p154
      %p157 = scmp.ne.s32.totalorder %s140, %s156
      %p158 = scmp.eq.s32.totalorder %s20, 0
      %p159 = por %p157, %p158
      %s160 = ssub.s32 %s21, %s33
      %s161 = ssub.s32 %s22, %s29
      %s162 = sor.u32 %s160, %s161
      %p163 = scmp.eq.s32.totalorder %s162, 0
      %s165 = sadd.s32 %s164, 1
      %s166 = scalar_select %p163, %s164, %s165
      %p169 = pneg %p163
      %p170 = scmp.eq.s32.totalorder %s14, 1
      %p171 = por %p169, %p170
      %p172 = scmp.ne.s32.totalorder %s164, %s167
      %p173 = scmp.eq.s32.totalorder %s14, 0
      %p174 = por %p172, %p173
      %p175 = scmp.ne.s32.totalorder %s164, %s167
      %p176 = scmp.eq.s32.totalorder %s19, 1
      %p177 = por %p175, %p176
      %p178 = scmp.ne.s32.totalorder %s167, %s168
      %p179 = scmp.eq.s32.totalorder %s19, 0
      %p180 = por %p178, %p179
      %p181 = scmp.ne.s32.totalorder %s167, %s168
      %p182 = scmp.eq.s32.totalorder %s20, 1
      %p183 = por %p181, %p182
      %p185 = scmp.ne.s32.totalorder %s168, %s184
      %p186 = scmp.eq.s32.totalorder %s20, 0
      %p187 = por %p185, %p186
      %p188 = scmp.le.s32.totalorder 1, %s14
      %p189 = scmp.lt.s32.totalorder %s14, 3
      %p190 = pnand %p188, %p189
      %p191 = pneg %p190
      // Predicated region
      $region9: #{tpu_custom_call.1} parent=5 // pred_check
        _
      $region10: #{tpu_custom_call.1} parent=5 // pred_check_branch
        %193 = sbr.rel (%p190) target = $region12
      $region11: #{tpu_custom_call.1} parent=5 // pred_region
        %s194 = ssub.s32 %s14, 1
        // Predicated region
        $region13: #{tpu_custom_call.1} parent=11 // pred_check
          %p195 = pneg %p75
        $region14: #{tpu_custom_call.1} parent=11 // pred_check_branch
          %197 = sbr.rel (%p195) target = $region16
        $region15: #{tpu_custom_call.1} parent=11 // pred_region
          _
        $region16: #{tpu_custom_call.1} parent=11 // pred_fallthru
          _
        // Predicated region
        $region17: #{tpu_custom_call.1} parent=11 // pred_check
          %p198 = pneg %p96
        $region18: #{tpu_custom_call.1} parent=11 // pred_check_branch
          %200 = sbr.rel (%p198) target = $region20
        $region19: #{tpu_custom_call.1} parent=11 // pred_region
          _
        $region20: #{tpu_custom_call.1} parent=11 // pred_fallthru
          _
      $region12: #{tpu_custom_call.1} parent=5 // pred_fallthru
        _
      %p201 = scmp.lt.s32.totalorder %s14, 2
      // Predicated region
      $region21: #{tpu_custom_call.1} parent=5 // pred_check
        %p202 = pneg %p201
      $region22: #{tpu_custom_call.1} parent=5 // pred_check_branch
        %204 = sbr.rel (%p202) target = $region24
      $region23: #{tpu_custom_call.1} parent=5 // pred_region
        // Predicated region
        $region25: #{tpu_custom_call.1} parent=23 // pred_check
          %p205 = pneg %p48
        $region26: #{tpu_custom_call.1} parent=23 // pred_check_branch
          %207 = sbr.rel (%p205) target = $region28
        $region27: #{tpu_custom_call.1} parent=23 // pred_region
          %p208 = scmp.lt.s32.totalorder %s21, 1
          %s209 = scalar_select %p208, %s21, 1
          %p210 = scmp.lt.s32.totalorder %s22, 0
          %s211 = scalar_select %p210, %s22, 0
          %s212 = smul.addr %s209, 4
          %s213 = sadd.s32 %s211, %s212
          %s214 = smul.addr %s213, 8
          %s215 = scalar_lea.vmem %s0, %s214
        $region28: #{tpu_custom_call.1} parent=23 // pred_fallthru
          _
        // Predicated region
        $region29: #{tpu_custom_call.1} parent=23 // pred_check
          %p216 = pneg %p118
        $region30: #{tpu_custom_call.1} parent=23 // pred_check_branch
          %218 = sbr.rel (%p216) target = $region32
        $region31: #{tpu_custom_call.1} parent=23 // pred_region
          %p219 = scmp.lt.s32.totalorder %s21, 1
          %s220 = scalar_select %p219, %s21, 1
          %p221 = scmp.lt.s32.totalorder %s22, 0
          %s222 = scalar_select %p221, %s22, 0
          %s223 = smul.addr %s222, 4
          %s224 = smul.addr %s220, 4
          %s225 = sadd.s32 %s223, %s224
          %s226 = smul.addr %s225, 8
          %s227 = scalar_lea.vmem %s3, %s226
        $region32: #{tpu_custom_call.1} parent=23 // pred_fallthru
          _
        // Predicated region
        $region33: #{tpu_custom_call.1} parent=23 // pred_check
          %p228 = pneg %p146
        $region34: #{tpu_custom_call.1} parent=23 // pred_check_branch
          %230 = sbr.rel (%p228) target = $region36
        $region35: #{tpu_custom_call.1} parent=23 // pred_region
          %p231 = scmp.lt.s32.totalorder %s21, 1
          %s232 = scalar_select %p231, %s21, 1
          %p233 = scmp.lt.s32.totalorder %s22, 0
          %s234 = scalar_select %p233, %s22, 0
          %s235 = smul.addr %s234, 4
          %s236 = smul.addr %s232, 4
          %s237 = sadd.s32 %s235, %s236
          %s238 = smul.addr %s237, 8
          %s239 = scalar_lea.vmem %s4, %s238
        $region36: #{tpu_custom_call.1} parent=23 // pred_fallthru
          _
      $region24: #{tpu_custom_call.1} parent=5 // pred_fallthru
        _
      %p240 = scmp.le.s32.totalorder 1, %s14
      %p241 = scmp.lt.s32.totalorder %s14, 3
      %p242 = pnand %p240, %p241
      %p243 = pneg %p242
      // Predicated region
      $region37: #{tpu_custom_call.1} parent=5 // pred_check
        _
      $region38: #{tpu_custom_call.1} parent=5 // pred_check_branch
        %245 = sbr.rel (%p242) target = $region40
      $region39: #{tpu_custom_call.1} parent=5 // pred_region
        %s246 = ssub.s32 %s14, 1
        %p247 = scmp.lt.s32.totalorder %s23, 1
        %s248 = scalar_select %p247, %s23, 1
        %p249 = scmp.lt.s32.totalorder %s24, 0
        %s250 = scalar_select %p249, %s24, 0
        %s251 = smul.addr %s248, 4
        %s252 = sadd.s32 %s250, %s251
        %s253 = smul.addr %s252, 8
        %s254 = scalar_lea.vmem %s0, %s253
        %p255 = pneg %p54
        %p256 = pneg %p51
        %p257 = pneg %p75
        %p258 = pneg %p72
        %p259 = pneg %p96
        %p260 = pneg %p93
        %p261 = scmp.lt.s32.totalorder %s23, 1
        %s262 = scalar_select %p261, %s23, 1
        %p263 = scmp.lt.s32.totalorder %s24, 0
        %s264 = scalar_select %p263, %s24, 0
        %s265 = smul.addr %s264, 4
        %s266 = smul.addr %s262, 4
        %s267 = sadd.s32 %s265, %s266
        %s268 = smul.addr %s267, 8
        %s269 = scalar_lea.vmem %s3, %s268
        %p270 = pneg %p124
        %p271 = pneg %p121
        %p272 = scmp.lt.s32.totalorder %s23, 1
        %s273 = scalar_select %p272, %s23, 1
        %p274 = scmp.lt.s32.totalorder %s24, 0
        %s275 = scalar_select %p274, %s24, 0
        %s276 = smul.addr %s275, 4
        %s277 = smul.addr %s273, 4
        %s278 = sadd.s32 %s276, %s277
        %s279 = smul.addr %s278, 8
        %s280 = scalar_lea.vmem %s4, %s279
        %p281 = pneg %p152
        %p282 = pneg %p149
        %p283 = pneg %p180
        %p284 = pneg %p177
        %s285 = sand.u32 %s167, 1
        %s286 = scalar_lea.sflag [#allocation3], %s285
        %s287 = sand.u32 %s167, 1
        %s288 = smul.addr %s287, 8
        %s289 = scalar_lea.vmem [#allocation2], %s288
        %p290 = scmp.lt.s32.totalorder %s23, 1
        %s291 = scalar_select %p290, %s23, 1
        %p292 = scmp.lt.s32.totalorder %s24, 0
        %s293 = scalar_select %p292, %s24, 0
        %s294 = smul.addr %s291, 4
        %s295 = sadd.s32 %s293, %s294
        %s296 = smul.addr %s295, 8
        %s297 = scalar_lea.vmem %s0, %s296
        %p298 = scmp.lt.s32.totalorder %s23, 1
        %s299 = scalar_select %p298, %s23, 1
        %p300 = scmp.lt.s32.totalorder %s24, 0
        %s301 = scalar_select %p300, %s24, 0
        %s302 = smul.addr %s301, 4
        %s303 = smul.addr %s299, 4
        %s304 = sadd.s32 %s302, %s303
        %s305 = smul.addr %s304, 8
        %s306 = scalar_lea.vmem %s3, %s305
        %p307 = scmp.lt.s32.totalorder %s23, 1
        %s308 = scalar_select %p307, %s23, 1
        %p309 = scmp.lt.s32.totalorder %s24, 0
        %s310 = scalar_select %p309, %s24, 0
        %s311 = smul.addr %s310, 4
        %s312 = smul.addr %s308, 4
        %s313 = sadd.s32 %s311, %s312
        %s314 = smul.addr %s313, 8
        %s315 = scalar_lea.vmem %s4, %s314
        %v316 = vld [vmem:[%s297] sm:$0xff]
        %v317 = vld [vmem:[%s297 + $0x8] sm:$0xff]
        %v318 = vld [vmem:[%s297 + $0x10] sm:$0xff]
        %v319 = vld [vmem:[%s297 + $0x18] sm:$0xff]
        %v320 = vlaneseq
        %v321 = vand.u32 %v320, 127
        %v322 = vld [vmem:[%s306] sm:$0xff]
        %v323 = vld [vmem:[%s306 + $0x8] sm:$0xff]
        %v324 = vld [vmem:[%s306 + $0x10] sm:$0xff]
        %v325 = vld [vmem:[%s306 + $0x18] sm:$0xff]
        %v326 = vld [vmem:[%s315] sm:$0xff]
        %v327 = vld [vmem:[%s315 + $0x8] sm:$0xff]
        %v328 = vld [vmem:[%s315 + $0x10] sm:$0xff]
        %v329 = vld [vmem:[%s315 + $0x18] sm:$0xff]
        %vm330 = vcmp.eq.s32.totalorder %v321, 0
        %vm331 = vcmask 1047680
        %332 = vrot.lane.b32.xlu0 %v316, 16
        %v333 = vpop.permute.xlu0 %332
        %v334 = vsel %vm331, %v333, %v316
        %335 = vrot.lane.b32.xlu0 %v317, 16
        %v336 = vpop.permute.xlu0 %335
        %v337 = vsel %vm331, %v336, %v317
        %338 = vrot.lane.b32.xlu0 %v318, 16
        %v339 = vpop.permute.xlu0 %338
        %v340 = vsel %vm331, %v339, %v318
        %341 = vrot.lane.b32.xlu0 %v319, 16
        %v342 = vpop.permute.xlu0 %341
        %v343 = vsel %vm331, %v342, %v319
        %344 = vrot.lane.b32.xlu0 %v334, 16
        %v345 = vpop.permute.xlu0 %344
        %346 = vrot.lane.b32.xlu0 %v337, 16
        %v347 = vpop.permute.xlu0 %346
        %348 = vrot.lane.b32.xlu0 %v340, 16
        %v349 = vpop.permute.xlu0 %348
        %350 = vrot.lane.b32.xlu0 %v343, 16
        %v351 = vpop.permute.xlu0 %350
        %v352 = vsel %vm331, %v345, %v316
        %v353 = vsel %vm331, %v347, %v317
        %v354 = vsel %vm331, %v349, %v318
        %v355 = vsel %vm331, %v351, %v319
        %357 = vset.pattern.permute.xlu0 0
        %358 = vperm.xlu0 %357, %v322
        %v359 = vpop.permute.xlu0 %358
        %362 = vset.pattern.permute.xlu0 0
        %363 = vperm.xlu0 %362, %v323
        %v364 = vpop.permute.xlu0 %363
        %367 = vset.pattern.permute.xlu0 0
        %368 = vperm.xlu0 %367, %v324
        %v369 = vpop.permute.xlu0 %368
        %372 = vset.pattern.permute.xlu0 0
        %373 = vperm.xlu0 %372, %v325
        %v374 = vpop.permute.xlu0 %373
        %380 = vrot.lane.b32.xlu0 %v352, 113
        %v381 = vpop.permute.xlu0 %380
        %382 = vrot.lane.b32.xlu0 %v353, 113
        %v383 = vpop.permute.xlu0 %382
        %384 = vrot.lane.b32.xlu0 %v354, 113
        %v385 = vpop.permute.xlu0 %384
        %386 = vrot.lane.b32.xlu0 %v355, 113
        %v387 = vpop.permute.xlu0 %386
        %v392 = vsel %vm330, %v359, %v381
        %v393 = vsel %vm330, %v364, %v383
        %v394 = vsel %vm330, %v369, %v385
        %v395 = vsel %vm330, %v374, %v387
        %vm396 = vcmp.eq.s32.totalorder %v321, 15
        %398 = vset.pattern.permute.xlu0 0
        %399 = vperm.xlu0 %398, %v326
        %v400 = vpop.permute.xlu0 %399
        %403 = vset.pattern.permute.xlu0 0
        %404 = vperm.xlu0 %403, %v327
        %v405 = vpop.permute.xlu0 %404
        %408 = vset.pattern.permute.xlu0 0
        %409 = vperm.xlu0 %408, %v328
        %v410 = vpop.permute.xlu0 %409
        %413 = vset.pattern.permute.xlu0 0
        %414 = vperm.xlu0 %413, %v329
        %v415 = vpop.permute.xlu0 %414
        %417 = vrot.lane.b32.xlu0 %v352, 127
        %v418 = vpop.permute.xlu0 %417
        %419 = vrot.lane.b32.xlu0 %v353, 127
        %v420 = vpop.permute.xlu0 %419
        %421 = vrot.lane.b32.xlu0 %v354, 127
        %v422 = vpop.permute.xlu0 %421
        %423 = vrot.lane.b32.xlu0 %v355, 127
        %v424 = vpop.permute.xlu0 %423
        %v429 = vsel %vm396, %v400, %v418
        %v430 = vsel %vm396, %v405, %v420
        %v431 = vsel %vm396, %v410, %v422
        %v432 = vsel %vm396, %v415, %v424
        %v433 = vld [vmem:[%s1] sm:$0xff]
        %v434 = vld [vmem:[%s2] sm:$0xff]
        %436 = vset.pattern.permute.xlu0 0
        %437 = vperm.xlu0 %436, %v434
        %v438 = vpop.permute.xlu0 %437
        %vm440 = vcmask 785408
        %v442 = vsel %vm440, %v433, 0
        %444 = vmatprep.subr.mxu0 0.0
        %445 = vmatpush1.msra.mxu0 0.0
        %446 = vmatprep.subr.mxu0 0.0
        %447 = vmatpush1.msra.mxu0 0.0
        %448 = vmatprep.subr.mxu0 0.0
        %449 = vmatpush1.msra.mxu0 0.0
        %450 = vmatprep.subr.mxu0 0.0
        %451 = vmatpush1.msra.mxu0 0.0
        %452 = vmatprep.subr.mxu0 0.0
        %453 = vmatpush1.msra.mxu0 %v432
        %454 = vmatprep.subr.mxu0 0.0
        %455 = vmatpush1.msra.mxu0 %v431
        %456 = vmatprep.subr.mxu0 0.0
        %457 = vmatpush1.msra.mxu0 %v430
        %458 = vmatprep.subr.mxu0 0.0
        %459 = vmatpush1.msra.mxu0 %v429
        %460 = vmatprep.subr.mxu0 0.0
        %461 = vmatpush1.msra.mxu0 %v319
        %462 = vmatprep.subr.mxu0 0.0
        %463 = vmatpush1.msra.mxu0 %v318
        %464 = vmatprep.subr.mxu0 0.0
        %465 = vmatpush1.msra.mxu0 %v317
        %466 = vmatprep.subr.mxu0 0.0
        %467 = vmatpush1.msra.mxu0 %v316
        %468 = vmatprep.subr.mxu0 0.0
        %469 = vmatpush1.msra.mxu0 %v395
        %470 = vmatprep.subr.mxu0 0.0
        %471 = vmatpush1.msra.mxu0 %v394
        %472 = vmatprep.subr.mxu0 0.0
        %473 = vmatpush1.msra.mxu0 %v393
        %474 = vmatprep.subr.mxu0 0.0
        %475 = vmatpush1.msra.mxu0 %v392
        %476 = vmatprep.subr.mxu0 0.0
        %477 = vmatpush2.msra.mxu0 0.0
        %478 = vmatprep.subr.mxu0 0.0
        %479 = vmatpush2.msra.mxu0 0.0
        %480 = vmatprep.subr.mxu0 0.0
        %481 = vmatpush2.msra.mxu0 0.0
        %482 = vmatprep.subr.mxu0 0.0
        %483 = vmatpush2.msra.mxu0 0.0
        %484 = vmatprep.subr.mxu0 0.0
        %485 = vmatpush2.msra.mxu0 0.0
        %486 = vmatprep.subr.mxu0 0.0
        %487 = vmatpush2.msra.mxu0 0.0
        %488 = vmatprep.subr.mxu0 0.0
        %489 = vmatpush2.msra.mxu0 0.0
        %490 = vmatprep.subr.mxu0 0.0
        %491 = vmatpush2.msra.mxu0 0.0
        %492 = vmatprep.subr.mxu0 0.0
        %493 = vmatpush2.msra.mxu0 0.0
        %494 = vmatprep.subr.mxu0 0.0
        %495 = vmatpush2.msra.mxu0 0.0
        %496 = vmatprep.subr.mxu0 0.0
        %497 = vmatpush2.msra.mxu0 0.0
        %498 = vmatprep.subr.mxu0 0.0
        %499 = vmatpush2.msra.mxu0 0.0
        %500 = vmatprep.subr.mxu0 0.0
        %501 = vmatpush2.msra.mxu0 0.0
        %502 = vmatprep.subr.mxu0 0.0
        %503 = vmatpush2.msra.mxu0 0.0
        %504 = vmatprep.subr.mxu0 0.0
        %505 = vmatpush2.msra.mxu0 0.0
        %506 = vmatprep.subr.mxu0 0.0
        %507 = vmatpush2.msra.mxu0 0.0
        %508 = vmatprep.mubr.f32.mxu0 0.0
        %509 = vmatmul.mubr.f32.gmra.mxu0 %v442
        %v510 = vpop.f32.mrf.mxu0
        %v511 = vadd.f32 %v438, %v510
        %v512 = vpop.f32.mrf.mxu0
        %513 = vdwg.mxu0
        %v514 = vmax.f32 %v511, 0.0
        %vm515 = vcmask 130048
        %516 = vst.msk [vmem:[%s289] sm:$0xff] %vm515, %v514
        %s517 = sand.u32 %s167, 1
        %s518 = scalar_lea.sflag [#allocation3], %s517
        %s519 = sand.u32 %s167, 1
        %s520 = smul.addr %s519, 8
        %s521 = scalar_lea.vmem [#allocation2], %s520
        // Predicated region
        $region41: #{tpu_custom_call.1} parent=39 // pred_check
          %p522 = pneg %p177
        $region42: #{tpu_custom_call.1} parent=39 // pred_check_branch
          %524 = sbr.rel (%p522) target = $region44
        $region43: #{tpu_custom_call.1} parent=39 // pred_region
          %s526 = ssub.s32 128, 128
          %527 = vsyncadd %s518, %s526
          %s528 = sadd.s32 %s24, %s23
          %s529 = smul.addr %s528, 128
          %s530 = scalar_lea.hbm %s5, %s529
          %s532 = sshll.u32 %s521, 4
          %s533 = int_to_ptr.vmem [resolvable:$true] %s532
          %535 = dma.vmem_to_hbm [thread:$0]  %s533, 128, %s530, %s518
        $region44: #{tpu_custom_call.1} parent=39 // pred_fallthru
          _
      $region40: #{tpu_custom_call.1} parent=5 // pred_fallthru
        _
      %p536 = scmp.le.s32.totalorder 2, %s14
      // Predicated region
      $region45: #{tpu_custom_call.1} parent=5 // pred_check
        %p537 = pneg %p536
      $region46: #{tpu_custom_call.1} parent=5 // pred_check_branch
        %539 = sbr.rel (%p537) target = $region48
      $region47: #{tpu_custom_call.1} parent=5 // pred_region
        %s540 = ssub.s32 %s14, 2
        // Predicated region
        $region49: #{tpu_custom_call.1} parent=47 // pred_check
          %p541 = pneg %p183
        $region50: #{tpu_custom_call.1} parent=47 // pred_check_branch
          %543 = sbr.rel (%p541) target = $region52
        $region51: #{tpu_custom_call.1} parent=47 // pred_region
          %s544 = sand.u32 %s168, 1
          %s545 = scalar_lea.sflag [#allocation3], %s544
          %s546 = sand.u32 %s168, 1
          %s547 = smul.addr %s546, 8
          %s548 = scalar_lea.vmem [#allocation2], %s547
          %549 = dma.done %s545, 128
        $region52: #{tpu_custom_call.1} parent=47 // pred_fallthru
          _
      $region48: #{tpu_custom_call.1} parent=5 // pred_fallthru
        _
    $region6: #{tpu_custom_call.1} parent=1 // loop_footer
      %s18 = sadd.s32 1, %s14
    $region7: #{tpu_custom_call.1} parent=1 // loop_footer_branch
      %13 = sbr.rel target = $region3
    $region8: #{tpu_custom_call.1} parent=1 // loop_exit
      _
    %550 = vsyncpa [#allocation3], 1
    %s551 = scalar_lea.sflag [#allocation3], 1
    %552 = vsyncpa %s551, 1

</llo_original>
